<compile_context>
chip_gen: v7x
topology: tpu7x:2x2x1
jax: 0.10.0
libtpu: 0.0.40
codegen_flags: <defaults>
</compile_context>

<pallas_src>
import functools

import jax
import jax.numpy as jnp
from jax.experimental import pallas as pl
from jax.experimental.pallas import tpu as pltpu

_SUB = 8                      # sublanes per vreg
_LANE = 128                   # lanes per vreg
_CHUNK = _SUB * _LANE         # 1024 elements per (8, 128) chunk
_MAX_CHUNKS_PER_TILE = 256    # 256 * 1024 elem * 3 ch * 4 B = 3 MiB/tile (f32)


def _l_color_kernel(x_ref, o_ref, acc_ref, *, inv_n):
    # x_ref:   (1, 3, Tt, 8, 128) lane-dense spatial tile of one image
    # o_ref:   (1, 1, 1, 1)
    # acc_ref: (3, 8, 128) f32 running per-channel partial sums
    t = pl.program_id(1)

    @pl.when(t == 0)
    def _init():
        acc_ref[...] = jnp.zeros_like(acc_ref)

    xs = x_ref[0]  # (3, Tt, 8, 128), stays in the input dtype
    # Steady state: reduce over the chunk axis (non-minor dim) = pure VPU
    # vreg adds, accumulated in f32. No cross-lane reduce in the hot loop.
    acc_ref[...] += jnp.sum(xs, axis=1, dtype=jnp.float32)

    @pl.when(t == pl.num_programs(1) - 1)
    def _finalize():
        # One lane reduce + one sublane reduce per image, then the tiny tail.
        s = jnp.sum(acc_ref[...], axis=2)               # (3, 8)
        m = jnp.sum(s, axis=1, keepdims=True) * inv_n   # (3, 1) channel means
        mr = m[0:1, :]
        mg = m[1:2, :]
        mb = m[2:3, :]
        drg = (mr - mg) ** 2
        drb = (mr - mb) ** 2
        dgb = (mb - mg) ** 2
        k = jnp.sqrt(drg * drg + drb * drb + dgb * dgb)  # (1, 1)
        o_ref[...] = k.reshape(o_ref.shape).astype(o_ref.dtype)


def l_color(x):
    """Pallas implementation of L_color.forward. x: (B, 3, H, W) -> (B, 1, 1, 1)."""
    b, c, h, w = x.shape
    assert c == 3, "L_color expects 3 (RGB) channels"
    n = h * w

    # Tile the flattened spatial axis into (8, 128) chunks.
    n_chunks = -(-n // _CHUNK)
    num_tiles = -(-n_chunks // _MAX_CHUNKS_PER_TILE)
    tt = -(-n_chunks // num_tiles)          # chunks per grid step
    t_total = num_tiles * tt
    pad = t_total * _CHUNK - n

    xf = x.reshape(b, c, n)
    if pad:
        # Zero padding: contributes 0 to the sums; we divide by the true H*W.
        xf = jnp.pad(xf, ((0, 0), (0, 0), (0, pad)))
    x5 = xf.reshape(b, c, t_total, _SUB, _LANE)  # lane-dense layout (free in HBM)

    kernel = functools.partial(_l_color_kernel, inv_n=1.0 / float(n))

    return pl.pallas_call(
        kernel,
        out_shape=jax.ShapeDtypeStruct((b, 1, 1, 1), x.dtype),
        grid_spec=pltpu.PrefetchScalarGridSpec(
            num_scalar_prefetch=0,
            grid=(b, num_tiles),
            in_specs=[
                pl.BlockSpec((1, c, tt, _SUB, _LANE),
                             lambda i, t: (i, 0, t, 0, 0)),
            ],
            out_specs=pl.BlockSpec((1, 1, 1, 1), lambda i, t: (i, 0, 0, 0)),
            scratch_shapes=[pltpu.VMEM((c, _SUB, _LANE), jnp.float32)],
        ),
        compiler_params=pltpu.CompilerParams(
            dimension_semantics=("parallel", "arbitrary"),
        ),
    )(x5)


def l_color_ref(x):
    """Pure-JAX reference matching the PyTorch forward exactly."""
    mean_rgb = jnp.mean(x, axis=(2, 3), keepdims=True)  # (B, 3, 1, 1)
    mr = mean_rgb[:, 0:1]
    mg = mean_rgb[:, 1:2]
    mb = mean_rgb[:, 2:3]
    drg = (mr - mg) ** 2
    drb = (mr - mb) ** 2
    dgb = (mb - mg) ** 2
    return jnp.sqrt(drg**2 + drb**2 + dgb**2)


if __name__ == "__main__":
    key = jax.random.PRNGKey(0)
    # Small shapes consistent with the module: batch=2, 3 RGB channels, 16x16.
    x = jax.random.uniform(key, (2, 3, 16, 16), dtype=jnp.float32)

    out = l_color(x)
    out = jax.block_until_ready(out)

    ref = l_color_ref(x)
    assert out.shape == (2, 1, 1, 1)
    assert jnp.allclose(out, ref, atol=1e-6, rtol=1e-5)

    print("KERNEL_OK")
</pallas_src>

<mosaic_0001>
module attributes {stable_mosaic.version = 11 : i64} {
  func.func @_l_color_kernel(%arg0: i32, %arg1: i32, %arg2: memref<1x3x1x8x128xf32, #tpu.memory_space<vmem>>, %arg3: memref<1x1x1x1xf32, #tpu.memory_space<vmem>>, %arg4: memref<3x8x128xf32, #tpu.memory_space<vmem>>) attributes {dimension_semantics = [#tpu.dimension_semantics<parallel>, #tpu.dimension_semantics<arbitrary>], iteration_bounds = array<i64: 2, 1>, scalar_prefetch = 0 : i64, scratch_operands = 1 : i64, tpu.core_type = #tpu.core_type<tc>, window_params = [{transform_indices = @transform_0, window_bounds = array<i64: 1, 3, 1, 8, 128>}, {transform_indices = @transform_1, window_bounds = array<i64: 1, 1, 1, 1>}]} {
    %c0_i32 = arith.constant 0 : i32
    %0 = arith.cmpi eq, %arg1, %c0_i32 : i32
    %1 = arith.extui %0 : i1 to i32
    %c0_i32_0 = arith.constant 0 : i32
    %2 = arith.cmpi ne, %1, %c0_i32_0 : i32
    scf.if %2 {
      %cst_13 = arith.constant 0.000000e+00 : f32
      %12 = vector.broadcast %cst_13 : f32 to vector<3x8x128xf32>
      %c0_14 = arith.constant 0 : index
      %c0_15 = arith.constant 0 : index
      %c0_16 = arith.constant 0 : index
      %13 = vector.load %arg4[%c0_14, %c0_15, %c0_16] : memref<3x8x128xf32, #tpu.memory_space<vmem>>, vector<3x8x128xf32>
      tpu.vector_store %arg4[%c0_14, %c0_15, %c0_16], %12 {strides = array<i32>} : memref<3x8x128xf32, #tpu.memory_space<vmem>>, vector<3x8x128xf32>,
    } else {
    }
    %c0 = arith.constant 0 : index
    %c0_1 = arith.constant 0 : index
    %c0_2 = arith.constant 0 : index
    %c0_3 = arith.constant 0 : index
    %c0_4 = arith.constant 0 : index
    %3 = vector.load %arg2[%c0, %c0_1, %c0_2, %c0_3, %c0_4] : memref<1x3x1x8x128xf32, #tpu.memory_space<vmem>>, vector<1x3x1x8x128xf32>
    %4 = vector.shape_cast %3 : vector<1x3x1x8x128xf32> to vector<3x1x8x128xf32>
    %c0_5 = arith.constant 0 : index
    %c0_6 = arith.constant 0 : index
    %c0_7 = arith.constant 0 : index
    %5 = vector.load %arg4[%c0_5, %c0_6, %c0_7] : memref<3x8x128xf32, #tpu.memory_space<vmem>>, vector<3x8x128xf32>
    %cst = arith.constant dense<0.000000e+00> : vector<3x8x128xf32>
    %6 = vector.multi_reduction <add>, %4, %cst [1] : vector<3x1x8x128xf32> to vector<3x8x128xf32>
    %7 = arith.addf %5, %6 : vector<3x8x128xf32>
    %c0_8 = arith.constant 0 : index
    %c0_9 = arith.constant 0 : index
    %c0_10 = arith.constant 0 : index
    %8 = vector.load %arg4[%c0_8, %c0_9, %c0_10] : memref<3x8x128xf32, #tpu.memory_space<vmem>>, vector<3x8x128xf32>
    tpu.vector_store %arg4[%c0_8, %c0_9, %c0_10], %7 {strides = array<i32>} : memref<3x8x128xf32, #tpu.memory_space<vmem>>, vector<3x8x128xf32>,
    %c0_i32_11 = arith.constant 0 : i32
    %9 = arith.cmpi eq, %arg1, %c0_i32_11 : i32
    %10 = arith.extui %9 : i1 to i32
    %c0_i32_12 = arith.constant 0 : i32
    %11 = arith.cmpi ne, %10, %c0_i32_12 : i32
    scf.if %11 {
      %c0_13 = arith.constant 0 : index
      %c0_14 = arith.constant 0 : index
      %c0_15 = arith.constant 0 : index
      %12 = vector.load %arg4[%c0_13, %c0_14, %c0_15] : memref<3x8x128xf32, #tpu.memory_space<vmem>>, vector<3x8x128xf32>
      %cst_16 = arith.constant dense<0.000000e+00> : vector<3x8xf32>
      %13 = vector.multi_reduction <add>, %12, %cst_16 [2] : vector<3x8x128xf32> to vector<3x8xf32>
      %cst_17 = arith.constant dense<0.000000e+00> : vector<3xf32>
      %14 = vector.multi_reduction <add>, %13, %cst_17 [1] : vector<3x8xf32> to vector<3xf32>
      %15 = vector.shape_cast %14 : vector<3xf32> to vector<3x1xf32>
      %cst_18 = arith.constant 3.906250e-03 : f32
      %16 = vector.broadcast %cst_18 : f32 to vector<3x1xf32>
      %17 = arith.mulf %15, %16 : vector<3x1xf32>
      %18 = vector.extract_strided_slice %17 {offsets = [0, 0], sizes = [1, 1], strides = [1, 1]} : vector<3x1xf32> to vector<1x1xf32>
      %19 = vector.extract_strided_slice %17 {offsets = [1, 0], sizes = [1, 1], strides = [1, 1]} : vector<3x1xf32> to vector<1x1xf32>
      %20 = vector.extract_strided_slice %17 {offsets = [2, 0], sizes = [1, 1], strides = [1, 1]} : vector<3x1xf32> to vector<1x1xf32>
      %21 = arith.subf %18, %19 : vector<1x1xf32>
      %22 = arith.mulf %21, %21 : vector<1x1xf32>
      %23 = arith.subf %18, %20 : vector<1x1xf32>
      %24 = arith.mulf %23, %23 : vector<1x1xf32>
      %25 = arith.subf %20, %19 : vector<1x1xf32>
      %26 = arith.mulf %25, %25 : vector<1x1xf32>
      %27 = arith.mulf %22, %22 : vector<1x1xf32>
      %28 = arith.mulf %24, %24 : vector<1x1xf32>
      %29 = arith.addf %27, %28 : vector<1x1xf32>
      %30 = arith.mulf %26, %26 : vector<1x1xf32>
      %31 = arith.addf %29, %30 : vector<1x1xf32>
      %32 = math.sqrt %31 : vector<1x1xf32>
      %33 = vector.shape_cast %32 : vector<1x1xf32> to vector<1x1x1x1xf32>
      %c0_19 = arith.constant 0 : index
      %c0_20 = arith.constant 0 : index
      %c0_21 = arith.constant 0 : index
      %c0_22 = arith.constant 0 : index
      %34 = vector.load %arg3[%c0_19, %c0_20, %c0_21, %c0_22] : memref<1x1x1x1xf32, #tpu.memory_space<vmem>>, vector<1x1x1x1xf32>
      tpu.vector_store %arg3[%c0_19, %c0_20, %c0_21, %c0_22], %33 {strides = array<i32>} : memref<1x1x1x1xf32, #tpu.memory_space<vmem>>, vector<1x1x1x1xf32>,
    } else {
    }
    return
  }
  func.func @transform_0(%arg0: i32, %arg1: i32) -> (i32, i32, i32, i32, i32) {
    %c0_i32 = arith.constant 0 : i32
    %c0_i32_0 = arith.constant 0 : i32
    %c0_i32_1 = arith.constant 0 : i32
    %c0_i32_2 = arith.constant 0 : i32
    return %arg0, %c0_i32, %arg1, %c0_i32_0, %c0_i32_1 : i32, i32, i32, i32, i32
  }
  func.func @transform_1(%arg0: i32, %arg1: i32) -> (i32, i32, i32, i32) {
    %c0_i32 = arith.constant 0 : i32
    %c0_i32_0 = arith.constant 0 : i32
    %c0_i32_1 = arith.constant 0 : i32
    %c0_i32_2 = arith.constant 0 : i32
    return %arg0, %c0_i32, %c0_i32_0, %c0_i32_1 : i32, i32, i32, i32
  }
}

</mosaic_0001>

<llo_original>
// kernel: tpu_custom_call.1
$region0: #{tpu_custom_call.1}
  #allocation0 [shape = 'u32[]', space=smem, size = 0x4, offset = 0x4, fixed_abs, tag = 'smem constant byte address 0x4 - core index']
  #allocation1 [shape = 'u32[144,128]{1,0:T(1,128)}', space=vmem, size = 0x12000, scoped, tag = 'internal scratch']
  #allocation2 [shape = 'f32[3,8,128]{2,1,0:T(8,128)}', space=vmem, size = 0x3000, scoped, tag = 'scratch operand']
  %s0 = inlined_call_operand.hbm [shape: f32[2,3,1,8,128], index: 0, kind: input, shape index: {}]
  %s1 = inlined_call_operand.vmem [shape: f32[2,1,1,1], index: 1, kind: output, shape index: {}]
  %s2 = sld [smem:[#allocation0]]
  $region49: #{tpu_custom_call.1} parent=0
    _
  %s4 = ssub.s32 1, %s2
  %s5 = scalar_select 0, %s4, %s2
  $region1: #{tpu_custom_call.1} parent=0
    #allocation3 [shape = 'u8[24576]{0}', space=vmem, size = 0x6000, scoped, tag = 'input window, operand 0']
    #allocation4 [shape = 's32[2]{0}', space=sflag, size = 0x8, scoped, tag = 'scoped memory for tpu_custom_call.1']
    %6 = vsyncpa [#allocation4], 0
    %s7 = scalar_lea.sflag [#allocation4], 1
    %8 = vsyncpa %s7, 0
    loop: start=0, step=1, limit=4
    $region2: #{tpu_custom_call.1} parent=1 // loop_pre_header
      _
    $region3: #{tpu_custom_call.1} parent=1 // loop_header
      %s10 = sphi 0, %s14
      %p11 = scmp.ge.s32.totalorder %s10, 4
      %s17 = sphi 0, %s29
      %s18 = sphi 0, %s25
      %s19 = sphi 0, %s17
      %s20 = sphi 0, %s18
      %s21 = sphi 0, %s19
      %s22 = sphi 0, %s20
      %s34 = sphi 0, %s36
      %s37 = sphi 0, %s34
      %s38 = sphi 0, %s37
      %s54 = sphi 0, %s38
      %s60 = sphi 0, %s62
      %s63 = sphi 0, %s60
      %s64 = sphi 0, %s63
      %s80 = sphi 0, %s64
    $region4: #{tpu_custom_call.1} parent=1 // loop_header_branch
      %13 = sbr.rel (%p11) target = $region8
    $region5: #{tpu_custom_call.1} parent=1 // loop_body
      %s15 = ssub.s32 %s10, 1
      %s16 = ssub.s32 %s10, 2
      %s23 = sadd.s32 1, %s18
      %p24 = scmp.ge.s32.totalorder %s23, 1
      %s25 = scalar_select %p24, 0, %s23
      %s26 = sadd.s32 1, %s17
      %s27 = scalar_select %p24, %s26, %s17
      %p28 = scmp.ge.s32.totalorder %s27, 2
      %s29 = scalar_select %p28, 0, %s27
      %s30 = ssub.s32 %s17, %s29
      %s31 = ssub.s32 %s18, %s25
      %s32 = sor.u32 %s30, %s31
      %p33 = scmp.eq.s32.totalorder %s32, 0
      %s35 = sadd.s32 %s34, 1
      %s36 = scalar_select %p33, %s34, %s35
      %p39 = pneg %p33
      %p40 = scmp.eq.s32.totalorder %s10, 1
      %p41 = por %p39, %p40
      %p42 = scmp.ne.s32.totalorder %s34, %s37
      %p43 = scmp.eq.s32.totalorder %s10, 0
      %p44 = por %p42, %p43
      %p45 = scmp.ne.s32.totalorder %s34, %s37
      %p46 = scmp.eq.s32.totalorder %s15, 1
      %p47 = por %p45, %p46
      %p48 = scmp.ne.s32.totalorder %s37, %s38
      %p49 = scmp.eq.s32.totalorder %s15, 0
      %p50 = por %p48, %p49
      %p51 = scmp.ne.s32.totalorder %s37, %s38
      %p52 = scmp.eq.s32.totalorder %s16, 1
      %p53 = por %p51, %p52
      %p55 = scmp.ne.s32.totalorder %s38, %s54
      %p56 = scmp.eq.s32.totalorder %s16, 0
      %p57 = por %p55, %p56
      %s58 = ssub.s32 %s17, %s29
      %p59 = scmp.eq.s32.totalorder %s58, 0
      %s61 = sadd.s32 %s60, 1
      %s62 = scalar_select %p59, %s60, %s61
      %p65 = pneg %p59
      %p66 = scmp.eq.s32.totalorder %s10, 1
      %p67 = por %p65, %p66
      %p68 = scmp.ne.s32.totalorder %s60, %s63
      %p69 = scmp.eq.s32.totalorder %s10, 0
      %p70 = por %p68, %p69
      %p71 = scmp.ne.s32.totalorder %s60, %s63
      %p72 = scmp.eq.s32.totalorder %s15, 1
      %p73 = por %p71, %p72
      %p74 = scmp.ne.s32.totalorder %s63, %s64
      %p75 = scmp.eq.s32.totalorder %s15, 0
      %p76 = por %p74, %p75
      %p77 = scmp.ne.s32.totalorder %s63, %s64
      %p78 = scmp.eq.s32.totalorder %s16, 1
      %p79 = por %p77, %p78
      %p81 = scmp.ne.s32.totalorder %s64, %s80
      %p82 = scmp.eq.s32.totalorder %s16, 0
      %p83 = por %p81, %p82
      %p84 = scmp.le.s32.totalorder 1, %s10
      %p85 = scmp.lt.s32.totalorder %s10, 3
      %p86 = pnand %p84, %p85
      %p87 = pneg %p86
      // Predicated region
      $region9: #{tpu_custom_call.1} parent=5 // pred_check
        _
      $region10: #{tpu_custom_call.1} parent=5 // pred_check_branch
        %89 = sbr.rel (%p86) target = $region12
      $region11: #{tpu_custom_call.1} parent=5 // pred_region
        %s90 = ssub.s32 %s10, 1
      $region12: #{tpu_custom_call.1} parent=5 // pred_fallthru
        _
      %p91 = scmp.lt.s32.totalorder %s10, 2
      // Predicated region
      $region13: #{tpu_custom_call.1} parent=5 // pred_check
        %p92 = pneg %p91
      $region14: #{tpu_custom_call.1} parent=5 // pred_check_branch
        %94 = sbr.rel (%p92) target = $region16
      $region15: #{tpu_custom_call.1} parent=5 // pred_region
        // Predicated region
        $region17: #{tpu_custom_call.1} parent=15 // pred_check
          %p95 = pneg %p44
        $region18: #{tpu_custom_call.1} parent=15 // pred_check_branch
          %97 = sbr.rel (%p95) target = $region20
        $region19: #{tpu_custom_call.1} parent=15 // pred_region
          %s98 = sand.u32 %s34, 1
          %s99 = scalar_lea.sflag [#allocation4], %s98
          %s100 = sand.u32 %s34, 1
          %s101 = smul.addr %s100, 24
          %s102 = scalar_lea.vmem [#allocation3], %s101
          %s104 = ssub.s32 384, 384
          %105 = vsyncadd %s99, %s104
          %s106 = smul.addr %s17, 3
          %s107 = sadd.s32 %s18, %s106
          %s108 = smul.addr %s107, 128
          %s109 = scalar_lea.hbm %s0, %s108
          %s110 = sshll.u32 %s102, 4
          %s111 = int_to_ptr.vmem [resolvable:$true] %s110
          %116 = dma.hbm_to_vmem [thread:$0]  %s109, 384, %s111, %s99, 128, 128, 8
        $region20: #{tpu_custom_call.1} parent=15 // pred_fallthru
          _
      $region16: #{tpu_custom_call.1} parent=5 // pred_fallthru
        _
      %p117 = scmp.le.s32.totalorder 1, %s10
      %p118 = scmp.lt.s32.totalorder %s10, 3
      %p119 = pnand %p117, %p118
      %p120 = pneg %p119
      // Predicated region
      $region21: #{tpu_custom_call.1} parent=5 // pred_check
        _
      $region22: #{tpu_custom_call.1} parent=5 // pred_check_branch
        %122 = sbr.rel (%p119) target = $region24
      $region23: #{tpu_custom_call.1} parent=5 // pred_region
        %s123 = ssub.s32 %s10, 1
        %s124 = sand.u32 %s37, 1
        %s125 = scalar_lea.sflag [#allocation4], %s124
        %s126 = sand.u32 %s37, 1
        %s127 = smul.addr %s126, 24
        %s128 = scalar_lea.vmem [#allocation3], %s127
        // Predicated region
        $region25: #{tpu_custom_call.1} parent=23 // pred_check
          %p129 = pneg %p50
        $region26: #{tpu_custom_call.1} parent=23 // pred_check_branch
          %131 = sbr.rel (%p129) target = $region28
        $region27: #{tpu_custom_call.1} parent=23 // pred_region
          %132 = dma.done %s125, 384
        $region28: #{tpu_custom_call.1} parent=23 // pred_fallthru
          _
        %s133 = sand.u32 %s37, 1
        %s134 = scalar_lea.sflag [#allocation4], %s133
        %s135 = sand.u32 %s37, 1
        %s136 = smul.addr %s135, 24
        %s137 = scalar_lea.vmem [#allocation3], %s136
        %p138 = pneg %p50
        %p139 = pneg %p47
        %p140 = pneg %p76
        %p141 = pneg %p73
        %p142 = scmp.lt.s32.totalorder %s19, 1
        %s143 = scalar_select %p142, %s19, 1
        %s144 = scalar_lea.vmem %s1, %s143
        %p145 = scmp.lt.s32.totalorder %s19, 1
        %s146 = scalar_select %p145, %s19, 1
        %s147 = scalar_lea.vmem %s1, %s146
        %p148 = scmp.eq.s32.totalorder %s20, 0
        // Predicated region
        $region29: #{tpu_custom_call.1} parent=23 // pred_check
          %p149 = pneg %p148
        $region30: #{tpu_custom_call.1} parent=23 // pred_check_branch
          %151 = sbr.rel (%p149) target = $region32
        $region31: #{tpu_custom_call.1} parent=23 // pred_region
          %152 = vst [vmem:[#allocation2] sm:$0xff] 0.0
          %153 = vst [vmem:[#allocation2 + $0x8] sm:$0xff] 0.0
          %154 = vst [vmem:[#allocation2 + $0x10] sm:$0xff] 0.0
        $region32: #{tpu_custom_call.1} parent=23 // pred_fallthru
          _
        %v155 = vld [vmem:[%s128] sm:$0xff]
        %v156 = vld [vmem:[%s128 + $0x8] sm:$0xff]
        %v157 = vld [vmem:[%s128 + $0x10] sm:$0xff]
        %v158 = vld [vmem:[#allocation2] sm:$0xff]
        %v159 = vld [vmem:[#allocation2 + $0x8] sm:$0xff]
        %v160 = vld [vmem:[#allocation2 + $0x10] sm:$0xff]
        %v161 = vadd.f32 %v155, 0.0
        %v162 = vadd.f32 %v156, 0.0
        %v163 = vadd.f32 %v157, 0.0
        %v164 = vadd.f32 %v158, %v161
        %v165 = vadd.f32 %v159, %v162
        %v166 = vadd.f32 %v160, %v163
        %167 = vst [vmem:[#allocation2] sm:$0xff] %v164
        %168 = vst [vmem:[#allocation2 + $0x8] sm:$0xff] %v165
        %169 = vst [vmem:[#allocation2 + $0x10] sm:$0xff] %v166
        // Predicated region
        $region33: #{tpu_custom_call.1} parent=23 // pred_check
          %p170 = pneg %p148
        $region34: #{tpu_custom_call.1} parent=23 // pred_check_branch
          %172 = sbr.rel (%p170) target = $region36
        $region35: #{tpu_custom_call.1} parent=23 // pred_region
          %v173 = vld [vmem:[#allocation2] sm:$0xff]
          %v174 = vld [vmem:[#allocation2 + $0x8] sm:$0xff]
          %v175 = vld [vmem:[#allocation2 + $0x10] sm:$0xff]
          %176 = vadd.xlane.f32.xlu0 %v173
          %v177 = vpop.xlane.xlu0 %176
          %178 = vadd.xlane.f32.xlu0 %v174
          %v179 = vpop.xlane.xlu0 %178
          %180 = vadd.xlane.f32.xlu0 %v175
          %v181 = vpop.xlane.xlu0 %180
          %v185 = vlaneseq
          %v186 = vand.u32 %v185, 127
          %v187 = vlaneseq
          %v188 = vshrl.u32 %v187, 7
          %v189 = vsub.s32 %v186, %v188
          %v190 = vrot.slane %v177, %v189
          %v191 = vlaneseq
          %v192 = vshrl.u32 %v191, 7
          %v193 = vsub.s32 %v186, %v192
          %v194 = vrot.slane %v179, %v193
          %v195 = vlaneseq
          %v196 = vshrl.u32 %v195, 7
          %v197 = vsub.s32 %v186, %v196
          %v198 = vrot.slane %v181, %v197
          %vm199 = vcmask 1041409
          %v200 = vsel %vm199, %v194, %v190
          %vm201 = vcmask 1042434
          %v202 = vsel %vm201, %v198, %v200
          %vm204 = vcmask 59392
          %v205 = vsel %vm204, %v202, 0.0
          %206 = vadd.xlane.f32.xlu0 %v205
          %v207 = vpop.xlane.xlu0 %206
          %v208 = vmul.f32 %v207, 0.00390625
          %v210 = vrot.slane %v208, 1
          %v212 = vsub.f32 %v208, %v210
          %v213 = vmul.f32 %v212, %v212
          %v214 = vrot.slane %v208, 2
          %v216 = vsub.f32 %v208, %v214
          %v217 = vmul.f32 %v216, %v216
          %v218 = vrot.slane %v208, 7
          %v220 = vsub.f32 %v208, %v218
          %v221 = vmul.f32 %v220, %v220
          %v222 = vmul.f32 %v213, %v213
          %v223 = vmul.f32 %v217, %v217
          %v224 = vadd.f32 %v222, %v223
          %v225 = vmul.f32 %v221, %v221
          %v227 = vrot.slane %v225, 2
          %v229 = vadd.f32 %v224, %v227
          %v230 = vrsqrt.pop %v229
          %v231 = vmul.f32 %v229, %v230
          %vm232 = vcmp.eq.f32.partialorder %v229, inf
          %v233 = vsel %vm232, %v229, %v231
          %vm234 = vcmp.eq.f32.partialorder %v229, 0.0
          %v235 = vand.u32 %v229, 2147483648
          %v236 = vsel %vm234, %v235, %v233
          %vm237 = vcmask 0
          %238 = vst.msk [vmem:[%s147] sm:$0x1] %vm237, %v236
        $region36: #{tpu_custom_call.1} parent=23 // pred_fallthru
          _
        %p239 = scmp.lt.s32.totalorder %s19, 1
        %s240 = scalar_select %p239, %s19, 1
        %s241 = scalar_lea.vmem %s1, %s240
        // Predicated region
        $region37: #{tpu_custom_call.1} parent=23 // pred_check
          %p242 = pneg %p73
        $region38: #{tpu_custom_call.1} parent=23 // pred_check_branch
          %244 = sbr.rel (%p242) target = $region40
        $region39: #{tpu_custom_call.1} parent=23 // pred_region
          _
        $region40: #{tpu_custom_call.1} parent=23 // pred_fallthru
          _
      $region24: #{tpu_custom_call.1} parent=5 // pred_fallthru
        _
      %p245 = scmp.le.s32.totalorder 2, %s10
      // Predicated region
      $region41: #{tpu_custom_call.1} parent=5 // pred_check
        %p246 = pneg %p245
      $region42: #{tpu_custom_call.1} parent=5 // pred_check_branch
        %248 = sbr.rel (%p246) target = $region44
      $region43: #{tpu_custom_call.1} parent=5 // pred_region
        %s249 = ssub.s32 %s10, 2
        // Predicated region
        $region45: #{tpu_custom_call.1} parent=43 // pred_check
          %p250 = pneg %p79
        $region46: #{tpu_custom_call.1} parent=43 // pred_check_branch
          %252 = sbr.rel (%p250) target = $region48
        $region47: #{tpu_custom_call.1} parent=43 // pred_region
          %p253 = scmp.lt.s32.totalorder %s21, 1
          %s254 = scalar_select %p253, %s21, 1
          %s255 = scalar_lea.vmem %s1, %s254
        $region48: #{tpu_custom_call.1} parent=43 // pred_fallthru
          _
      $region44: #{tpu_custom_call.1} parent=5 // pred_fallthru
        _
    $region6: #{tpu_custom_call.1} parent=1 // loop_footer
      %s14 = sadd.s32 1, %s10
    $region7: #{tpu_custom_call.1} parent=1 // loop_footer_branch
      %9 = sbr.rel target = $region3
    $region8: #{tpu_custom_call.1} parent=1 // loop_exit
      _
    %256 = vsyncpa [#allocation4], 1
    %s257 = scalar_lea.sflag [#allocation4], 1
    %258 = vsyncpa %s257, 1

</llo_original>
